<compile_context>
chip_gen: v7x
topology: tpu7x:2x2x1
jax: 0.10.0
libtpu: 0.0.40
codegen_flags: <defaults>
</compile_context>

<pallas_src>
import functools

import jax
import jax.numpy as jnp
from jax.experimental import pallas as pl
from jax.experimental.pallas import tpu as pltpu

_LANE = 128
_SUBLANE = 8


def _round_up(x, m):
    return (x + m - 1) // m * m


def _mlp_pool_kernel(x_ref, wc_ref, bc_ref, w12_ref, b12_ref, o_ref, *, tb, t):
    # x_ref block: (tb*t, Dp) bf16 -> tb batch elements, t timesteps each.
    x = x_ref[...]

    # connector + relu, f32 accumulation on the MXU.
    h = jnp.dot(x, wc_ref[...], preferred_element_type=jnp.float32)
    h = jnp.maximum(h + bc_ref[...], 0.0)                       # (tb*t, Hp) f32

    # mean over time: sublane-axis sum * 1/T on the blocked layout.
    hp = h.reshape(tb, t, h.shape[-1])
    pooled = jnp.sum(hp, axis=1) * (1.0 / t)                    # (tb, Hp) f32

    # folded fc1+fc2: pooled @ (W1 @ W2) + (b1 @ W2 + b2)
    out = jnp.dot(pooled.astype(w12_ref.dtype), w12_ref[...],
                  preferred_element_type=jnp.float32)
    o_ref[...] = (out + b12_ref[...]).astype(o_ref.dtype)       # (tb, Cp)


def mlp_pool_forward(features, params, *, compute_dtype=jnp.bfloat16):
    """features: (B, T, D) float32 -> (B, C) float32."""
    B, T, D = features.shape
    wc, bc, w1, b1, w2, b2 = params            # wc:(D,H) bc:(1,H) w1:(H,H) w2:(H,C)
    H = wc.shape[1]
    C = w2.shape[1]

    Dp = _round_up(D, _LANE)
    Hp = _round_up(H, _LANE)
    Cp = _round_up(C, _LANE)
    TB = _SUBLANE                              # batch elements per grid step
    Bp = _round_up(B, TB)

    # Fold fc1 + fc2 offline (exact algebra, fp32): pooling commutes with the
    # affine fc1, so  fc2(fc1(pooled)) == pooled @ (W1 @ W2) + (b1 @ W2 + b2).
    w12 = w1 @ w2                              # (H, C)
    b12 = b1 @ w2 + b2                         # (1, C)

    # Zero-pad to lane/sublane-aligned shapes; flatten rows (batch-major).
    x = jnp.pad(features, ((0, Bp - B), (0, 0), (0, Dp - D)))
    x = x.reshape(Bp * T, Dp).astype(compute_dtype)

    wc_p = jnp.pad(wc, ((0, Dp - D), (0, Hp - H))).astype(compute_dtype)
    bc_p = jnp.pad(bc, ((0, 0), (0, Hp - H)))                     # f32
    w12_p = jnp.pad(w12, ((0, Hp - H), (0, Cp - C))).astype(compute_dtype)
    b12_p = jnp.pad(b12, ((0, 0), (0, Cp - C)))                   # f32

    grid = (Bp // TB,)
    rows_per_block = TB * T

    # TODO(synk): for large H (e.g. >= 4096) tile the Hp contraction with a k
    # grid axis + accumulator scratch instead of keeping full weights resident
    # (v7x VMEM is 64 MiB), and raise vmem_limit_bytes with headroom.
    out_padded = pl.pallas_call(
        functools.partial(_mlp_pool_kernel, tb=TB, t=T),
        out_shape=jax.ShapeDtypeStruct((Bp, Cp), jnp.float32),
        grid_spec=pltpu.PrefetchScalarGridSpec(
            num_scalar_prefetch=0,
            grid=grid,
            in_specs=[
                pl.BlockSpec((rows_per_block, Dp), lambda i: (i, 0)),  # x rows
                pl.BlockSpec((Dp, Hp), lambda i: (0, 0)),              # connector W
                pl.BlockSpec((1, Hp), lambda i: (0, 0)),               # connector b
                pl.BlockSpec((Hp, Cp), lambda i: (0, 0)),              # folded W12
                pl.BlockSpec((1, Cp), lambda i: (0, 0)),               # folded b12
            ],
            out_specs=pl.BlockSpec((TB, Cp), lambda i: (i, 0)),        # lane-dense slab
        ),
        compiler_params=pltpu.CompilerParams(
            dimension_semantics=("parallel",)),
    )(x, wc_p, bc_p, w12_p, b12_p)

    return out_padded[:B, :C]


def init_params(key, input_dim, hidden_dim, output_class_num):
    """Deterministic init mimicking nn.Linear (uniform +-1/sqrt(fan_in))."""
    ks = jax.random.split(key, 6)

    def lin(kw, kb, fan_in, fan_out):
        bound = 1.0 / jnp.sqrt(fan_in)
        w = jax.random.uniform(kw, (fan_in, fan_out), jnp.float32, -bound, bound)
        b = jax.random.uniform(kb, (1, fan_out), jnp.float32, -bound, bound)
        return w, b

    wc, bc = lin(ks[0], ks[1], input_dim, hidden_dim)
    w1, b1 = lin(ks[2], ks[3], hidden_dim, hidden_dim)
    w2, b2 = lin(ks[4], ks[5], hidden_dim, output_class_num)
    return (wc, bc, w1, b1, w2, b2)


def reference_forward(features, params):
    """Pure-JAX fp32 reference matching the PyTorch module order exactly."""
    wc, bc, w1, b1, w2, b2 = params
    h = jax.nn.relu(features @ wc + bc[0])
    h = h @ w1 + b1[0]
    pooled = h.mean(axis=1)
    return pooled @ w2 + b2[0]


if __name__ == "__main__":
    B, T = 2, 8
    input_dim, hidden_dim, output_class_num = 32, 32, 10

    key = jax.random.PRNGKey(0)
    k_x, k_p = jax.random.split(key)
    features = jax.random.normal(k_x, (B, T, input_dim), jnp.float32)
    params = init_params(k_p, input_dim, hidden_dim, output_class_num)

    out = mlp_pool_forward(features, params)
    out = jax.block_until_ready(out)

    ref = reference_forward(features, params)
    assert out.shape == (B, output_class_num)
    # bf16 matmul operands (f32 accumulation) -> compare at bf16-level tolerance.
    assert jnp.allclose(out, ref, atol=2e-2, rtol=2e-2), (
        f"max abs err {jnp.max(jnp.abs(out - ref))}")

    print("KERNEL_OK")
</pallas_src>

<mosaic_0001>
module attributes {stable_mosaic.version = 11 : i64} {
  func.func @_mlp_pool_kernel(%arg0: i32, %arg1: memref<64x128xbf16, #tpu.memory_space<vmem>>, %arg2: memref<128x128xbf16, #tpu.memory_space<vmem>>, %arg3: memref<1x128xf32, #tpu.memory_space<vmem>>, %arg4: memref<128x128xbf16, #tpu.memory_space<vmem>>, %arg5: memref<1x128xf32, #tpu.memory_space<vmem>>, %arg6: memref<8x128xf32, #tpu.memory_space<vmem>>) attributes {dimension_semantics = [#tpu.dimension_semantics<parallel>], iteration_bounds = array<i64: 1>, scalar_prefetch = 0 : i64, scratch_operands = 0 : i64, tpu.core_type = #tpu.core_type<tc>, window_params = [{transform_indices = @transform_0, window_bounds = array<i64: 64, 128>}, {pipeline_mode = #tpu.pipeline_mode<synchronous>, transform_indices = @transform_1, window_bounds = array<i64: 128, 128>}, {pipeline_mode = #tpu.pipeline_mode<synchronous>, transform_indices = @transform_2, window_bounds = array<i64: 1, 128>}, {pipeline_mode = #tpu.pipeline_mode<synchronous>, transform_indices = @transform_3, window_bounds = array<i64: 128, 128>}, {pipeline_mode = #tpu.pipeline_mode<synchronous>, transform_indices = @transform_4, window_bounds = array<i64: 1, 128>}, {transform_indices = @transform_5, window_bounds = array<i64: 8, 128>}]} {
    %c0 = arith.constant 0 : index
    %c0_0 = arith.constant 0 : index
    %0 = vector.load %arg1[%c0, %c0_0] : memref<64x128xbf16, #tpu.memory_space<vmem>>, vector<64x128xbf16>
    %c0_1 = arith.constant 0 : index
    %c0_2 = arith.constant 0 : index
    %1 = vector.load %arg2[%c0_1, %c0_2] : memref<128x128xbf16, #tpu.memory_space<vmem>>, vector<128x128xbf16>
    %cst = arith.constant dense<0.000000e+00> : vector<64x128xf32>
    %2 = tpu.matmul %0, %1, %cst {dimension_numbers = #tpu.dot_dimension_numbers<[1], [0], [0], [1], [0, 0, 1, 1], [], []>} : vector<64x128xbf16>, vector<128x128xbf16>, vector<64x128xf32> -> vector<64x128xf32>
    %c0_3 = arith.constant 0 : index
    %c0_4 = arith.constant 0 : index
    %3 = vector.load %arg3[%c0_3, %c0_4] : memref<1x128xf32, #tpu.memory_space<vmem>>, vector<1x128xf32>
    %4 = vector.broadcast %3 : vector<1x128xf32> to vector<64x128xf32>
    %5 = arith.addf %2, %4 : vector<64x128xf32>
    %cst_5 = arith.constant 0.000000e+00 : f32
    %6 = vector.broadcast %cst_5 : f32 to vector<64x128xf32>
    %7 = arith.maximumf %5, %6 : vector<64x128xf32>
    %8 = vector.shape_cast %7 : vector<64x128xf32> to vector<8x8x128xf32>
    %cst_6 = arith.constant dense<0.000000e+00> : vector<8x128xf32>
    %9 = vector.multi_reduction <add>, %8, %cst_6 [1] : vector<8x8x128xf32> to vector<8x128xf32>
    %cst_7 = arith.constant 1.250000e-01 : f32
    %10 = vector.broadcast %cst_7 : f32 to vector<8x128xf32>
    %11 = arith.mulf %9, %10 : vector<8x128xf32>
    %12 = arith.truncf %11 : vector<8x128xf32> to vector<8x128xbf16>
    %c0_8 = arith.constant 0 : index
    %c0_9 = arith.constant 0 : index
    %13 = vector.load %arg4[%c0_8, %c0_9] : memref<128x128xbf16, #tpu.memory_space<vmem>>, vector<128x128xbf16>
    %cst_10 = arith.constant dense<0.000000e+00> : vector<8x128xf32>
    %14 = tpu.matmul %12, %13, %cst_10 {dimension_numbers = #tpu.dot_dimension_numbers<[1], [0], [0], [1], [0, 0, 1, 1], [], []>} : vector<8x128xbf16>, vector<128x128xbf16>, vector<8x128xf32> -> vector<8x128xf32>
    %c0_11 = arith.constant 0 : index
    %c0_12 = arith.constant 0 : index
    %15 = vector.load %arg5[%c0_11, %c0_12] : memref<1x128xf32, #tpu.memory_space<vmem>>, vector<1x128xf32>
    %16 = vector.broadcast %15 : vector<1x128xf32> to vector<8x128xf32>
    %17 = arith.addf %14, %16 : vector<8x128xf32>
    %c0_13 = arith.constant 0 : index
    %c0_14 = arith.constant 0 : index
    %18 = vector.load %arg6[%c0_13, %c0_14] : memref<8x128xf32, #tpu.memory_space<vmem>>, vector<8x128xf32>
    tpu.vector_store %arg6[%c0_13, %c0_14], %17 {strides = array<i32>} : memref<8x128xf32, #tpu.memory_space<vmem>>, vector<8x128xf32>,
    return
  }
  func.func @transform_0(%arg0: i32) -> (i32, i32) {
    %c0_i32 = arith.constant 0 : i32
    %c0_i32_0 = arith.constant 0 : i32
    return %arg0, %c0_i32 : i32, i32
  }
  func.func @transform_1(%arg0: i32) -> (i32, i32) {
    %c0_i32 = arith.constant 0 : i32
    %c0_i32_0 = arith.constant 0 : i32
    %c0_i32_1 = arith.constant 0 : i32
    return %c0_i32, %c0_i32_0 : i32, i32
  }
  func.func @transform_2(%arg0: i32) -> (i32, i32) {
    %c0_i32 = arith.constant 0 : i32
    %c0_i32_0 = arith.constant 0 : i32
    %c0_i32_1 = arith.constant 0 : i32
    return %c0_i32, %c0_i32_0 : i32, i32
  }
  func.func @transform_3(%arg0: i32) -> (i32, i32) {
    %c0_i32 = arith.constant 0 : i32
    %c0_i32_0 = arith.constant 0 : i32
    %c0_i32_1 = arith.constant 0 : i32
    return %c0_i32, %c0_i32_0 : i32, i32
  }
  func.func @transform_4(%arg0: i32) -> (i32, i32) {
    %c0_i32 = arith.constant 0 : i32
    %c0_i32_0 = arith.constant 0 : i32
    %c0_i32_1 = arith.constant 0 : i32
    return %c0_i32, %c0_i32_0 : i32, i32
  }
  func.func @transform_5(%arg0: i32) -> (i32, i32) {
    %c0_i32 = arith.constant 0 : i32
    %c0_i32_0 = arith.constant 0 : i32
    return %arg0, %c0_i32 : i32, i32
  }
}

</mosaic_0001>

<llo_original>
// kernel: tpu_custom_call.1
$region0: #{tpu_custom_call.1}
  #allocation0 [shape = 'u32[]', space=smem, size = 0x4, offset = 0x4, fixed_abs, tag = 'smem constant byte address 0x4 - core index']
  #allocation1 [shape = 'u32[144,128]{1,0:T(1,128)}', space=vmem, size = 0x12000, scoped, tag = 'internal scratch']
  %s0 = inlined_call_operand.hbm [shape: bf16[64,128], index: 0, kind: input, shape index: {}]
  %s1 = inlined_call_operand.hbm [shape: bf16[128,128], index: 1, kind: input, shape index: {}]
  %s2 = inlined_call_operand.vmem [shape: f32[1,128], index: 2, kind: input, shape index: {}]
  %s3 = inlined_call_operand.hbm [shape: bf16[128,128], index: 3, kind: input, shape index: {}]
  %s4 = inlined_call_operand.vmem [shape: f32[1,128], index: 4, kind: input, shape index: {}]
  %s5 = inlined_call_operand.hbm [shape: f32[8,128], index: 5, kind: output, shape index: {}]
  %s6 = sld [smem:[#allocation0]]
  $region42: #{tpu_custom_call.1} parent=0
    _
  %s8 = ssub.s32 1, %s6
  %s9 = scalar_select 0, %s8, %s6
  $region1: #{tpu_custom_call.1} parent=0
    #allocation2 [shape = 'u8[16384]{0}', space=vmem, size = 0x4000, scoped, tag = 'input window, operand 0, single buffered']
    #allocation3 [shape = 's32[1]{0}', space=sflag, size = 0x4, scoped, tag = 'scoped memory for tpu_custom_call.1']
    #allocation4 [shape = 's32[1]{0}', space=sflag, size = 0x4, scoped, tag = 'scoped memory for tpu_custom_call.1']
    #allocation5 [shape = 'u8[32768]{0}', space=vmem, size = 0x8000, scoped, tag = 'input window, operand 1, single buffered']
    #allocation6 [shape = 's32[1]{0}', space=sflag, size = 0x4, scoped, tag = 'scoped memory for tpu_custom_call.1']
    #allocation7 [shape = 'u8[32768]{0}', space=vmem, size = 0x8000, scoped, tag = 'input window, operand 3, single buffered']
    #allocation8 [shape = 'u8[4096]{0}', space=vmem, size = 0x1000, scoped, tag = 'output window, operand 0, single buffered']
    %10 = vsyncpa [#allocation3], 0
    %11 = vsyncpa [#allocation6], 0
    %12 = vsyncpa [#allocation4], 0
    // Predicated region
    $region2: #{tpu_custom_call.1} parent=1 // pred_check
      _
    $region3: #{tpu_custom_call.1} parent=1 // pred_check_branch
      %14 = sbr.rel (0) target = $region5
    $region4: #{tpu_custom_call.1} parent=1 // pred_region
      %s16 = ssub.s32 512, 512
      %17 = vsyncadd [#allocation3], %s16
      %s18 = sshll.u32 [#allocation2], 4
      %s19 = int_to_ptr.vmem [resolvable:$true] %s18
      %24 = dma.hbm_to_vmem [thread:$0]  %s0, 512, %s19, [#allocation3], 64, 64, 4
    $region5: #{tpu_custom_call.1} parent=1 // pred_fallthru
      _
    // Predicated region
    $region6: #{tpu_custom_call.1} parent=1 // pred_check
      _
    $region7: #{tpu_custom_call.1} parent=1 // pred_check_branch
      %26 = sbr.rel (0) target = $region9
    $region8: #{tpu_custom_call.1} parent=1 // pred_region
      %s28 = ssub.s32 1024, 1024
      %29 = vsyncadd [#allocation6], %s28
      %s30 = sshll.u32 [#allocation5], 4
      %s31 = int_to_ptr.vmem [resolvable:$true] %s30
      %36 = dma.hbm_to_vmem [thread:$0]  %s1, 1024, %s31, [#allocation6], 64, 64, 4
    $region9: #{tpu_custom_call.1} parent=1 // pred_fallthru
      _
    // Predicated region
    $region10: #{tpu_custom_call.1} parent=1 // pred_check
      _
    $region11: #{tpu_custom_call.1} parent=1 // pred_check_branch
      %38 = sbr.rel (0) target = $region13
    $region12: #{tpu_custom_call.1} parent=1 // pred_region
      _
    $region13: #{tpu_custom_call.1} parent=1 // pred_fallthru
      _
    // Predicated region
    $region14: #{tpu_custom_call.1} parent=1 // pred_check
      _
    $region15: #{tpu_custom_call.1} parent=1 // pred_check_branch
      %40 = sbr.rel (0) target = $region17
    $region16: #{tpu_custom_call.1} parent=1 // pred_region
      %s42 = ssub.s32 1024, 1024
      %43 = vsyncadd [#allocation6], %s42
      %s44 = sshll.u32 [#allocation7], 4
      %s45 = int_to_ptr.vmem [resolvable:$true] %s44
      %50 = dma.hbm_to_vmem [thread:$0]  %s3, 1024, %s45, [#allocation6], 64, 64, 4
    $region17: #{tpu_custom_call.1} parent=1 // pred_fallthru
      _
    // Predicated region
    $region18: #{tpu_custom_call.1} parent=1 // pred_check
      _
    $region19: #{tpu_custom_call.1} parent=1 // pred_check_branch
      %52 = sbr.rel (0) target = $region21
    $region20: #{tpu_custom_call.1} parent=1 // pred_region
      _
    $region21: #{tpu_custom_call.1} parent=1 // pred_fallthru
      _
    // Predicated region
    $region22: #{tpu_custom_call.1} parent=1 // pred_check
      _
    $region23: #{tpu_custom_call.1} parent=1 // pred_check_branch
      %54 = sbr.rel (0) target = $region25
    $region24: #{tpu_custom_call.1} parent=1 // pred_region
      %55 = dma.done [#allocation3], 512
    $region25: #{tpu_custom_call.1} parent=1 // pred_fallthru
      _
    // Predicated region
    $region26: #{tpu_custom_call.1} parent=1 // pred_check
      _
    $region27: #{tpu_custom_call.1} parent=1 // pred_check_branch
      %57 = sbr.rel (0) target = $region29
    $region28: #{tpu_custom_call.1} parent=1 // pred_region
      %58 = dma.done [#allocation6], 1024
    $region29: #{tpu_custom_call.1} parent=1 // pred_fallthru
      _
    // Predicated region
    $region30: #{tpu_custom_call.1} parent=1 // pred_check
      _
    $region31: #{tpu_custom_call.1} parent=1 // pred_check_branch
      %60 = sbr.rel (0) target = $region33
    $region32: #{tpu_custom_call.1} parent=1 // pred_region
      %61 = dma.done [#allocation6], 1024
    $region33: #{tpu_custom_call.1} parent=1 // pred_fallthru
      _
    %v63 = vld [vmem:[#allocation2] sm:$0xf]
    %v64 = vld [vmem:[#allocation2 + $0x4] sm:$0xf]
    %v65 = vld [vmem:[#allocation2 + $0x8] sm:$0xf]
    %v66 = vld [vmem:[#allocation2 + $0xc] sm:$0xf]
    %v67 = vld [vmem:[#allocation2 + $0x10] sm:$0xf]
    %v68 = vld [vmem:[#allocation2 + $0x14] sm:$0xf]
    %v69 = vld [vmem:[#allocation2 + $0x18] sm:$0xf]
    %v70 = vld [vmem:[#allocation2 + $0x1c] sm:$0xf]
    %v71 = vld [vmem:[#allocation5] sm:$0xf]
    %v72 = vld [vmem:[#allocation5 + $0x4] sm:$0xf]
    %v73 = vld [vmem:[#allocation5 + $0x8] sm:$0xf]
    %v74 = vld [vmem:[#allocation5 + $0xc] sm:$0xf]
    %v75 = vld [vmem:[#allocation5 + $0x10] sm:$0xf]
    %v76 = vld [vmem:[#allocation5 + $0x14] sm:$0xf]
    %v77 = vld [vmem:[#allocation5 + $0x18] sm:$0xf]
    %v78 = vld [vmem:[#allocation5 + $0x1c] sm:$0xf]
    %v79 = vld [vmem:[#allocation5 + $0x20] sm:$0xf]
    %v80 = vld [vmem:[#allocation5 + $0x24] sm:$0xf]
    %v81 = vld [vmem:[#allocation5 + $0x28] sm:$0xf]
    %v82 = vld [vmem:[#allocation5 + $0x2c] sm:$0xf]
    %v83 = vld [vmem:[#allocation5 + $0x30] sm:$0xf]
    %v84 = vld [vmem:[#allocation5 + $0x34] sm:$0xf]
    %v85 = vld [vmem:[#allocation5 + $0x38] sm:$0xf]
    %v86 = vld [vmem:[#allocation5 + $0x3c] sm:$0xf]
    %v87 = vld [vmem:[%s2] sm:$0x1]
    %v89 = vlaneseq
    %v90 = vshrl.u32 %v89, 7
    %v91 = vsub.s32 0, %v90
    %v92 = vrot.slane %v87, %v91
    %v102 = vunpack.c.l.b16 %v63
    %v103 = vunpack.c.l.b16 %v64
    %v104 = vunpack.c.l.b16 %v65
    %v105 = vunpack.c.l.b16 %v66
    %v106 = vunpack.c.l.b16 %v67
    %v107 = vunpack.c.l.b16 %v68
    %v108 = vunpack.c.l.b16 %v69
    %v109 = vunpack.c.l.b16 %v70
    %v110 = vpack.c.b16 %v103, %v102
    %v111 = vpack.c.b16 %v105, %v104
    %v112 = vpack.c.b16 %v107, %v106
    %v113 = vpack.c.b16 %v109, %v108
    %v134 = vunpack.c.l.b16 %v71
    %v135 = vunpack.c.l.b16 %v72
    %v136 = vunpack.c.l.b16 %v73
    %v137 = vunpack.c.l.b16 %v74
    %v138 = vunpack.c.l.b16 %v75
    %v139 = vunpack.c.l.b16 %v76
    %v140 = vunpack.c.l.b16 %v77
    %v141 = vunpack.c.l.b16 %v78
    %v142 = vunpack.c.l.b16 %v79
    %v143 = vunpack.c.l.b16 %v80
    %v144 = vunpack.c.l.b16 %v81
    %v145 = vunpack.c.l.b16 %v82
    %v146 = vunpack.c.l.b16 %v83
    %v147 = vunpack.c.l.b16 %v84
    %v148 = vunpack.c.l.b16 %v85
    %v149 = vunpack.c.l.b16 %v86
    %v150 = vpack.c.b16 %v135, %v134
    %v151 = vpack.c.b16 %v137, %v136
    %v152 = vpack.c.b16 %v139, %v138
    %v153 = vpack.c.b16 %v141, %v140
    %v154 = vpack.c.b16 %v143, %v142
    %v155 = vpack.c.b16 %v145, %v144
    %v156 = vpack.c.b16 %v147, %v146
    %v157 = vpack.c.b16 %v149, %v148
    %166 = vmatprep.subr.bf16.mxu0 0
    %167 = vmatpush1.bf16.msra.mxu0 %v150
    %168 = vmatprep.subr.bf16.mxu0 0
    %169 = vmatpush1.bf16.msra.mxu0 %v151
    %170 = vmatprep.subr.bf16.mxu0 0
    %171 = vmatpush1.bf16.msra.mxu0 %v152
    %172 = vmatprep.subr.bf16.mxu0 0
    %173 = vmatpush1.bf16.msra.mxu0 %v153
    %174 = vmatprep.subr.bf16.mxu0 0
    %175 = vmatpush1.bf16.msra.mxu0 %v154
    %176 = vmatprep.subr.bf16.mxu0 0
    %177 = vmatpush1.bf16.msra.mxu0 %v155
    %178 = vmatprep.subr.bf16.mxu0 0
    %179 = vmatpush1.bf16.msra.mxu0 %v156
    %180 = vmatprep.subr.bf16.mxu0 0
    %181 = vmatpush1.bf16.msra.mxu0 %v157
    %182 = vmatprep.subr.bf16.mxu0 0
    %183 = vmatpush1.bf16.msra.mxu0 0
    %184 = vmatprep.subr.bf16.mxu0 0
    %185 = vmatpush1.bf16.msra.mxu0 0
    %186 = vmatprep.subr.bf16.mxu0 0
    %187 = vmatpush1.bf16.msra.mxu0 0
    %188 = vmatprep.subr.bf16.mxu0 0
    %189 = vmatpush1.bf16.msra.mxu0 0
    %190 = vmatprep.subr.bf16.mxu0 0
    %191 = vmatpush1.bf16.msra.mxu0 0
    %192 = vmatprep.subr.bf16.mxu0 0
    %193 = vmatpush1.bf16.msra.mxu0 0
    %194 = vmatprep.subr.bf16.mxu0 0
    %195 = vmatpush1.bf16.msra.mxu0 0
    %196 = vmatprep.subr.bf16.mxu0 0
    %197 = vmatpush1.bf16.msra.mxu0 0
    %198 = vmatprep.mubr.bf16.mxu0 0
    %199 = vmatmul.mubr.bf16.gmra.mrb[0].mxu0 %v110
    %v200 = vpop.f32.mrb[0].mxu0
    %v201 = vadd.f32 %v92, %v200
    %v202 = vpop.f32.mrb[0].mxu0
    %v203 = vpop.f32.mrb[0].mxu0
    %v204 = vadd.f32 %v92, %v203
    %v205 = vpop.f32.mrb[0].mxu0
    %206 = vmatprep.mubr.bf16.mxu0 0
    %207 = vmatmul.mubr.bf16.gmra.mrb[0].mxu0 %v111
    %v208 = vpop.f32.mrb[0].mxu0
    %v209 = vadd.f32 %v92, %v208
    %v210 = vpop.f32.mrb[0].mxu0
    %v211 = vpop.f32.mrb[0].mxu0
    %v212 = vadd.f32 %v92, %v211
    %v213 = vpop.f32.mrb[0].mxu0
    %214 = vmatprep.mubr.bf16.mxu0 0
    %215 = vmatmul.mubr.bf16.gmra.mrb[0].mxu0 %v112
    %v216 = vpop.f32.mrb[0].mxu0
    %v217 = vadd.f32 %v92, %v216
    %v218 = vpop.f32.mrb[0].mxu0
    %v219 = vpop.f32.mrb[0].mxu0
    %v220 = vadd.f32 %v92, %v219
    %v221 = vpop.f32.mrb[0].mxu0
    %222 = vmatprep.mubr.bf16.mxu0 0
    %223 = vmatmul.mubr.bf16.gmra.mrb[0].mxu0 %v113
    %v224 = vpop.f32.mrb[0].mxu0
    %v225 = vadd.f32 %v92, %v224
    %v226 = vpop.f32.mrb[0].mxu0
    %v227 = vpop.f32.mrb[0].mxu0
    %v228 = vadd.f32 %v92, %v227
    %v229 = vpop.f32.mrb[0].mxu0
    %230 = vdwg.mxu0
    %v231 = vmax.f32 %v201, 0.0
    %v232 = vmax.f32 %v204, 0.0
    %v233 = vmax.f32 %v209, 0.0
    %v234 = vmax.f32 %v212, 0.0
    %v235 = vmax.f32 %v217, 0.0
    %v236 = vmax.f32 %v220, 0.0
    %v237 = vmax.f32 %v225, 0.0
    %v238 = vmax.f32 %v228, 0.0
    %v239 = vrot.slane %v231, 4
    %v240 = vadd.f32 %v231, %v239
    %v241 = vrot.slane %v240, 2
    %v242 = vadd.f32 %v240, %v241
    %v243 = vrot.slane %v242, 1
    %v244 = vadd.f32 %v242, %v243
    %v245 = vrot.slane %v232, 4
    %v246 = vadd.f32 %v232, %v245
    %v247 = vrot.slane %v246, 2
    %v248 = vadd.f32 %v246, %v247
    %v249 = vrot.slane %v248, 1
    %v250 = vadd.f32 %v248, %v249
    %v251 = vrot.slane %v233, 4
    %v252 = vadd.f32 %v233, %v251
    %v253 = vrot.slane %v252, 2
    %v254 = vadd.f32 %v252, %v253
    %v255 = vrot.slane %v254, 1
    %v256 = vadd.f32 %v254, %v255
    %v257 = vrot.slane %v234, 4
    %v258 = vadd.f32 %v234, %v257
    %v259 = vrot.slane %v258, 2
    %v260 = vadd.f32 %v258, %v259
    %v261 = vrot.slane %v260, 1
    %v262 = vadd.f32 %v260, %v261
    %v263 = vrot.slane %v235, 4
    %v264 = vadd.f32 %v235, %v263
    %v265 = vrot.slane %v264, 2
    %v266 = vadd.f32 %v264, %v265
    %v267 = vrot.slane %v266, 1
    %v268 = vadd.f32 %v266, %v267
    %v269 = vrot.slane %v236, 4
    %v270 = vadd.f32 %v236, %v269
    %v271 = vrot.slane %v270, 2
    %v272 = vadd.f32 %v270, %v271
    %v273 = vrot.slane %v272, 1
    %v274 = vadd.f32 %v272, %v273
    %v275 = vrot.slane %v237, 4
    %v276 = vadd.f32 %v237, %v275
    %v277 = vrot.slane %v276, 2
    %v278 = vadd.f32 %v276, %v277
    %v279 = vrot.slane %v278, 1
    %v280 = vadd.f32 %v278, %v279
    %v281 = vrot.slane %v238, 4
    %v282 = vadd.f32 %v238, %v281
    %v283 = vrot.slane %v282, 2
    %v284 = vadd.f32 %v282, %v283
    %v285 = vrot.slane %v284, 1
    %v286 = vadd.f32 %v284, %v285
    %v287 = vmul.f32 %v244, 0.125
    %v288 = vmul.f32 %v250, 0.125
    %v289 = vmul.f32 %v256, 0.125
    %v290 = vmul.f32 %v262, 0.125
    %v291 = vmul.f32 %v268, 0.125
    %v292 = vmul.f32 %v274, 0.125
    %v293 = vmul.f32 %v280, 0.125
    %v294 = vmul.f32 %v286, 0.125
    %v295 = vpack.c.bf16 %v287, %v287
    %v296 = vpack.c.bf16 %v288, %v288
    %v297 = vpack.c.bf16 %v289, %v289
    %v298 = vpack.c.bf16 %v290, %v290
    %v299 = vpack.c.bf16 %v291, %v291
    %v300 = vpack.c.bf16 %v292, %v292
    %v301 = vpack.c.bf16 %v293, %v293
    %v302 = vpack.c.bf16 %v294, %v294
    %v303 = vld [vmem:[#allocation7] sm:$0xf]
    %v304 = vld [vmem:[#allocation7 + $0x4] sm:$0xf]
    %v305 = vld [vmem:[#allocation7 + $0x8] sm:$0xf]
    %v306 = vld [vmem:[#allocation7 + $0xc] sm:$0xf]
    %v307 = vld [vmem:[#allocation7 + $0x10] sm:$0xf]
    %v308 = vld [vmem:[#allocation7 + $0x14] sm:$0xf]
    %v309 = vld [vmem:[#allocation7 + $0x18] sm:$0xf]
    %v310 = vld [vmem:[#allocation7 + $0x1c] sm:$0xf]
    %v311 = vld [vmem:[#allocation7 + $0x20] sm:$0xf]
    %v312 = vld [vmem:[#allocation7 + $0x24] sm:$0xf]
    %v313 = vld [vmem:[#allocation7 + $0x28] sm:$0xf]
    %v314 = vld [vmem:[#allocation7 + $0x2c] sm:$0xf]
    %v315 = vld [vmem:[#allocation7 + $0x30] sm:$0xf]
    %v316 = vld [vmem:[#allocation7 + $0x34] sm:$0xf]
    %v317 = vld [vmem:[#allocation7 + $0x38] sm:$0xf]
    %v318 = vld [vmem:[#allocation7 + $0x3c] sm:$0xf]
    %v319 = vld [vmem:[%s4] sm:$0x1]
    %v321 = vlaneseq
    %v322 = vshrl.u32 %v321, 7
    %v323 = vsub.s32 0, %v322
    %v324 = vrot.slane %v319, %v323
    %v334 = vunpack.c.l.b16 %v295
    %v335 = vunpack.c.l.b16 %v296
    %v336 = vunpack.c.l.b16 %v297
    %v337 = vunpack.c.l.b16 %v298
    %v338 = vunpack.c.l.b16 %v299
    %v339 = vunpack.c.l.b16 %v300
    %v340 = vunpack.c.l.b16 %v301
    %v341 = vunpack.c.l.b16 %v302
    %vm342 = vcmask 1041409
    %v343 = vsel %vm342, %v335, %v334
    %vm344 = vcmask 1042434
    %v345 = vsel %vm344, %v336, %v343
    %vm346 = vcmask 1043459
    %v347 = vsel %vm346, %v337, %v345
    %vm348 = vcmask 1044484
    %v349 = vsel %vm348, %v338, %v347
    %vm350 = vcmask 1045509
    %v351 = vsel %vm350, %v339, %v349
    %vm352 = vcmask 1046534
    %v353 = vsel %vm352, %v340, %v351
    %vm354 = vcmask 1047559
    %v355 = vsel %vm354, %v341, %v353
    %v356 = vpack.c.b16 %v355, %v355
    %v374 = vunpack.c.l.b16 %v303
    %v375 = vunpack.c.l.b16 %v304
    %v376 = vunpack.c.l.b16 %v305
    %v377 = vunpack.c.l.b16 %v306
    %v378 = vunpack.c.l.b16 %v307
    %v379 = vunpack.c.l.b16 %v308
    %v380 = vunpack.c.l.b16 %v309
    %v381 = vunpack.c.l.b16 %v310
    %v382 = vunpack.c.l.b16 %v311
    %v383 = vunpack.c.l.b16 %v312
    %v384 = vunpack.c.l.b16 %v313
    %v385 = vunpack.c.l.b16 %v314
    %v386 = vunpack.c.l.b16 %v315
    %v387 = vunpack.c.l.b16 %v316
    %v388 = vunpack.c.l.b16 %v317
    %v389 = vunpack.c.l.b16 %v318
    %v390 = vpack.c.b16 %v375, %v374
    %v391 = vpack.c.b16 %v377, %v376
    %v392 = vpack.c.b16 %v379, %v378
    %v393 = vpack.c.b16 %v381, %v380
    %v394 = vpack.c.b16 %v383, %v382
    %v395 = vpack.c.b16 %v385, %v384
    %v396 = vpack.c.b16 %v387, %v386
    %v397 = vpack.c.b16 %v389, %v388
    %406 = vmatprep.subr.bf16.mxu0 0
    %407 = vmatpush1.bf16.msra.mxu0 %v390
    %408 = vmatprep.subr.bf16.mxu0 0
    %409 = vmatpush1.bf16.msra.mxu0 %v391
    %410 = vmatprep.subr.bf16.mxu0 0
    %411 = vmatpush1.bf16.msra.mxu0 %v392
    %412 = vmatprep.subr.bf16.mxu0 0
    %413 = vmatpush1.bf16.msra.mxu0 %v393
    %414 = vmatprep.subr.bf16.mxu0 0
    %415 = vmatpush1.bf16.msra.mxu0 %v394
    %416 = vmatprep.subr.bf16.mxu0 0
    %417 = vmatpush1.bf16.msra.mxu0 %v395
    %418 = vmatprep.subr.bf16.mxu0 0
    %419 = vmatpush1.bf16.msra.mxu0 %v396
    %420 = vmatprep.subr.bf16.mxu0 0
    %421 = vmatpush1.bf16.msra.mxu0 %v397
    %422 = vmatprep.subr.bf16.mxu0 0
    %423 = vmatpush1.bf16.msra.mxu0 0
    %424 = vmatprep.subr.bf16.mxu0 0
    %425 = vmatpush1.bf16.msra.mxu0 0
    %426 = vmatprep.subr.bf16.mxu0 0
    %427 = vmatpush1.bf16.msra.mxu0 0
    %428 = vmatprep.subr.bf16.mxu0 0
    %429 = vmatpush1.bf16.msra.mxu0 0
    %430 = vmatprep.subr.bf16.mxu0 0
    %431 = vmatpush1.bf16.msra.mxu0 0
    %432 = vmatprep.subr.bf16.mxu0 0
    %433 = vmatpush1.bf16.msra.mxu0 0
    %434 = vmatprep.subr.bf16.mxu0 0
    %435 = vmatpush1.bf16.msra.mxu0 0
    %436 = vmatprep.subr.bf16.mxu0 0
    %437 = vmatpush1.bf16.msra.mxu0 0
    %438 = vmatprep.mubr.bf16.mxu0 0
    %439 = vmatmul.mubr.bf16.gmra.mrb[0].mxu0 %v356
    %v440 = vpop.f32.mrb[0].mxu0
    %v441 = vadd.f32 %v324, %v440
    %v442 = vpop.f32.mrb[0].mxu0
    %v443 = vpop.f32.mrb[0].mxu0
    %v444 = vpop.f32.mrb[0].mxu0
    %445 = vdwg.mxu0
    %446 = vst [vmem:[#allocation8] sm:$0xff] %v441
    // Predicated region
    $region34: #{tpu_custom_call.1} parent=1 // pred_check
      _
    $region35: #{tpu_custom_call.1} parent=1 // pred_check_branch
      %448 = sbr.rel (0) target = $region37
    $region36: #{tpu_custom_call.1} parent=1 // pred_region
      %s450 = ssub.s32 128, 128
      %451 = vsyncadd [#allocation4], %s450
      %s453 = sshll.u32 [#allocation8], 4
      %s454 = int_to_ptr.vmem [resolvable:$true] %s453
      %456 = dma.vmem_to_hbm [thread:$0]  %s454, 128, %s5, [#allocation4]
    $region37: #{tpu_custom_call.1} parent=1 // pred_fallthru
      _
    // Predicated region
    $region38: #{tpu_custom_call.1} parent=1 // pred_check
      _
    $region39: #{tpu_custom_call.1} parent=1 // pred_check_branch
      %458 = sbr.rel (0) target = $region41
    $region40: #{tpu_custom_call.1} parent=1 // pred_region
      %459 = dma.done [#allocation4], 128
    $region41: #{tpu_custom_call.1} parent=1 // pred_fallthru
      _
    %460 = vsyncpa [#allocation3], 1
    %461 = vsyncpa [#allocation6], 1
    %462 = vsyncpa [#allocation4], 1

</llo_original>
